<compile_context>
chip_gen: v5e
topology: v5e:2x2
jax: 0.10.0
libtpu: 0.0.40
codegen_flags: <defaults>
</compile_context>

<pallas_src>
import jax
import jax.numpy as jnp
from jax import lax
from jax.experimental import pallas as pl
from jax.experimental.pallas import tpu as pltpu

NEG_SLOPE = 6.9187868
LANE = 128
MAX_TILE_W = 32768     # per-step DMA tile cap (lanes)
CHUNK_W = 1024         # in-kernel lane chunk (register-resident compute)


def fused_kernel(x_ref, x2_ref, w_ref, b_ref, out_ref):
    """x_ref: (KH, TW) VMEM, x2_ref: (1, TW) VMEM, w_ref: (C, KH, 1) VMEM,
    b_ref: (C,) SMEM, out_ref: (C, KH, TW) VMEM."""
    kh, tw = x_ref.shape
    c_out = out_ref.shape[0]
    chunk = min(tw, CHUNK_W)
    n_chunks = tw // chunk            # exact: tw <= CHUNK_W or multiple of it

    # Hoisted once per grid step: per-channel weight columns and bias scalars.
    w_cols = [w_ref[c] for c in range(c_out)]     # each (KH, 1)
    b_vals = [b_ref[c] for c in range(c_out)]     # scalars from SMEM

    def compute(start):
        xs = x_ref[:, pl.ds(start, chunk)]        # (KH, chunk)
        x2s = x2_ref[:, pl.ds(start, chunk)]      # (1, chunk)
        for c in range(c_out):
            # Conv2d(1->C, (KH,1)) with input height == KH: packed multiply by
            # the (KH,1) weight column + cross-sublane reduce.
            v1 = jnp.sum(xs * w_cols[c], axis=0, keepdims=True) + b_vals[c]
            # v5 = -where(v1>0, v1, slope*v1): negation fused into the select.
            v6 = x2s * jnp.where(v1 > 0.0, -v1, v1 * (-NEG_SLOPE))  # (1, chunk)
            # Final where broadcasts (1, chunk) against xs (KH, chunk); one
            # lane-dense (KH, chunk) store per channel.
            out_ref[c, :, pl.ds(start, chunk)] = jnp.where(v6 >= 0.0, v6, xs)

    if n_chunks == 1:
        compute(0)
    else:
        def body(ci, carry):
            compute(pl.multiple_of(ci * chunk, chunk))
            return carry
        lax.fori_loop(0, n_chunks, body, 0)


def _round_up(v, m):
    return ((v + m - 1) // m) * m


def model_forward(x, x2, weight, bias):
    """x: (1,1,KH,W), x2: (1,1,1,W), weight: (C,1,KH,1), bias: (C,)."""
    n, c_in, h, w = x.shape
    c_out, _, kh, kw = weight.shape
    assert n == 1 and c_in == 1 and kw == 1 and h == kh, (
        "this model only broadcasts correctly when conv output height == 1")
    assert x2.shape == (1, 1, 1, w)

    x2d = x[0, 0].astype(jnp.float32)                # (KH, W)  -> VMEM tiles
    x22d = x2[0, 0].astype(jnp.float32)              # (1, W)   -> VMEM tiles
    w3d = weight[:, 0, :, :].astype(jnp.float32)     # (C, KH, 1) -> VMEM
    b1d = bias.astype(jnp.float32)                   # (C,)     -> SMEM

    # Tile selection: >= ~4 grid steps when W is large enough, tile a multiple
    # of 128 (and of CHUNK_W when chunked), capped at MAX_TILE_W.
    tile_w = _round_up(pl.cdiv(w, 4), LANE)
    tile_w = min(tile_w, _round_up(w, LANE), MAX_TILE_W)
    if tile_w > CHUNK_W:
        tile_w = _round_up(tile_w, CHUNK_W)
    tile_w = max(tile_w, LANE)
    n_tiles = pl.cdiv(w, tile_w)

    bytes_accessed = 4 * w * (kh + 1 + c_out * kh)      # ~124*W bytes
    flops = w * c_out * (2 * kh + 5)

    out = pl.pallas_call(
        fused_kernel,
        out_shape=jax.ShapeDtypeStruct((c_out, kh, w), jnp.float32),
        grid=(n_tiles,),
        in_specs=[
            pl.BlockSpec((kh, tile_w), lambda i: (0, i)),           # x
            pl.BlockSpec((1, tile_w), lambda i: (0, i)),            # x2
            pl.BlockSpec((c_out, kh, 1), lambda i: (0, 0, 0)),      # weight
            pl.BlockSpec(memory_space=pltpu.MemorySpace.SMEM),      # bias
        ],
        out_specs=pl.BlockSpec((c_out, kh, tile_w), lambda i: (0, 0, i)),
        compiler_params=pltpu.CompilerParams(
            dimension_semantics=("parallel",)),
        cost_estimate=pl.CostEstimate(
            flops=int(flops), transcendentals=0,
            bytes_accessed=int(bytes_accessed)),
    )(x2d, x22d, w3d, b1d)

    return out[None]                 # (1, C, KH, W) NCHW


def reference_forward(x, x2, weight, bias):
    # Plain-JAX reference (VPU-style reduce, no MXU) for correctness checks.
    x2d = x[0, 0].astype(jnp.float32)                 # (KH, W)
    w2d = weight[:, 0, :, 0].astype(jnp.float32)      # (C, KH)
    v1 = jnp.sum(w2d[:, :, None] * x2d[None, :, :], axis=1) + bias[:, None]
    v4 = jnp.where(v1 > 0, v1, v1 * NEG_SLOPE)
    v5 = -v4
    v6 = x2[0, 0] * v5                                # (C, W)
    out = jnp.where(v6[:, None, :] >= 0, v6[:, None, :], x2d[None, :, :])
    return out[None]                                  # (1, C, KH, W)


if __name__ == "__main__":
    KH = 10
    key = jax.random.PRNGKey(0)
    kx, kx2, kw, kb = jax.random.split(key, 4)

    weight = jax.random.normal(kw, (2, 1, KH, 1), dtype=jnp.float32) * 0.1
    bias = jax.random.normal(kb, (2,), dtype=jnp.float32) * 0.1

    # W values exercise: multi-tile grid with ragged last block (640 -> 3
    # tiles of 256), a single sub-128-wide block (100), and the in-kernel
    # chunk loop (5000 -> 3 tiles of 2048, 2 chunks per tile).
    for w_cols in (640, 100, 5000):
        x = jax.random.normal(kx, (1, 1, KH, w_cols), dtype=jnp.float32)
        x2 = jax.random.normal(kx2, (1, 1, 1, w_cols), dtype=jnp.float32)

        out = model_forward(x, x2, weight, bias)
        out = jax.block_until_ready(out)

        ref = reference_forward(x, x2, weight, bias)
        assert out.shape == (1, 2, KH, w_cols), out.shape
        assert jnp.allclose(out, ref, atol=1e-5, rtol=1e-5)

    print("KERNEL_OK")
</pallas_src>

<mosaic_0001>
module attributes {stable_mosaic.version = 11 : i64} {
  func.func @fused_kernel(%arg0: i32, %arg1: memref<10x256xf32, #tpu.memory_space<vmem>>, %arg2: memref<1x256xf32, #tpu.memory_space<vmem>>, %arg3: memref<2x10x1xf32, #tpu.memory_space<vmem>>, %arg4: memref<2xf32, #tpu.memory_space<smem>>, %arg5: memref<2x10x256xf32, #tpu.memory_space<vmem>>) attributes {dimension_semantics = [#tpu.dimension_semantics<parallel>], iteration_bounds = array<i64: 3>, scalar_prefetch = 0 : i64, scratch_operands = 0 : i64, tpu.core_type = #tpu.core_type<tc>, window_params = [{transform_indices = @transform_0, window_bounds = array<i64: 10, 256>}, {transform_indices = @transform_1, window_bounds = array<i64: 1, 256>}, {pipeline_mode = #tpu.pipeline_mode<synchronous>, transform_indices = @transform_2, window_bounds = array<i64: 2, 10, 1>}, {transform_indices = @transform_3, window_bounds = array<i64: 2>}, {transform_indices = @transform_4, window_bounds = array<i64: 2, 10, 256>}]} {
    %c0 = arith.constant 0 : index
    %c0_0 = arith.constant 0 : index
    %c0_1 = arith.constant 0 : index
    %0 = vector.load %arg3[%c0, %c0_0, %c0_1] : memref<2x10x1xf32, #tpu.memory_space<vmem>>, vector<1x10x1xf32>
    %1 = vector.shape_cast %0 : vector<1x10x1xf32> to vector<10x1xf32>
    %c1 = arith.constant 1 : index
    %c0_2 = arith.constant 0 : index
    %c0_3 = arith.constant 0 : index
    %2 = vector.load %arg3[%c1, %c0_2, %c0_3] : memref<2x10x1xf32, #tpu.memory_space<vmem>>, vector<1x10x1xf32>
    %3 = vector.shape_cast %2 : vector<1x10x1xf32> to vector<10x1xf32>
    %c0_4 = arith.constant 0 : index
    %4 = memref.load %arg4[%c0_4] : memref<2xf32, #tpu.memory_space<smem>>
    %c1_5 = arith.constant 1 : index
    %5 = memref.load %arg4[%c1_5] : memref<2xf32, #tpu.memory_space<smem>>
    %c0_6 = arith.constant 0 : index
    %c0_7 = arith.constant 0 : index
    %6 = vector.load %arg1[%c0_6, %c0_7] : memref<10x256xf32, #tpu.memory_space<vmem>>, vector<10x256xf32>
    %c0_8 = arith.constant 0 : index
    %c0_9 = arith.constant 0 : index
    %7 = vector.load %arg2[%c0_8, %c0_9] : memref<1x256xf32, #tpu.memory_space<vmem>>, vector<1x256xf32>
    %8 = vector.broadcast %1 : vector<10x1xf32> to vector<10x256xf32>
    %9 = arith.mulf %6, %8 : vector<10x256xf32>
    %cst = arith.constant dense<0.000000e+00> : vector<256xf32>
    %10 = vector.multi_reduction <add>, %9, %cst [0] : vector<10x256xf32> to vector<256xf32>
    %11 = vector.shape_cast %10 : vector<256xf32> to vector<1x256xf32>
    %12 = vector.broadcast %4 : f32 to vector<1x256xf32>
    %13 = arith.addf %11, %12 : vector<1x256xf32>
    %cst_10 = arith.constant 0.000000e+00 : f32
    %14 = vector.broadcast %cst_10 : f32 to vector<1x256xf32>
    %15 = arith.cmpf ogt, %13, %14 : vector<1x256xf32>
    %cst_11 = arith.constant 0.000000e+00 : f32
    %16 = vector.broadcast %cst_11 : f32 to vector<1x256xf32>
    %17 = arith.subf %16, %13 : vector<1x256xf32>
    %cst_12 = arith.constant -6.918787 : f32
    %18 = vector.broadcast %cst_12 : f32 to vector<1x256xf32>
    %19 = arith.mulf %13, %18 : vector<1x256xf32>
    %20 = arith.select %15, %17, %19 : vector<1x256xi1>, vector<1x256xf32>
    %21 = arith.mulf %7, %20 : vector<1x256xf32>
    %cst_13 = arith.constant 0.000000e+00 : f32
    %22 = vector.broadcast %cst_13 : f32 to vector<1x256xf32>
    %23 = arith.cmpf oge, %21, %22 : vector<1x256xf32>
    %24 = vector.shape_cast %23 : vector<1x256xi1> to vector<1x256xi1>
    %25 = vector.broadcast %24 : vector<1x256xi1> to vector<10x256xi1>
    %26 = vector.shape_cast %21 : vector<1x256xf32> to vector<1x256xf32>
    %27 = vector.broadcast %26 : vector<1x256xf32> to vector<10x256xf32>
    %28 = arith.select %25, %27, %6 : vector<10x256xi1>, vector<10x256xf32>
    %c0_14 = arith.constant 0 : index
    %c0_15 = arith.constant 0 : index
    %c0_16 = arith.constant 0 : index
    %29 = vector.load %arg5[%c0_14, %c0_15, %c0_16] : memref<2x10x256xf32, #tpu.memory_space<vmem>>, vector<1x10x256xf32>
    %30 = vector.shape_cast %29 : vector<1x10x256xf32> to vector<10x256xf32>
    %31 = vector.shape_cast %28 : vector<10x256xf32> to vector<1x10x256xf32>
    tpu.vector_store %arg5[%c0_14, %c0_15, %c0_16], %31 {strides = array<i32>} : memref<2x10x256xf32, #tpu.memory_space<vmem>>, vector<1x10x256xf32>,
    %32 = vector.broadcast %3 : vector<10x1xf32> to vector<10x256xf32>
    %33 = arith.mulf %6, %32 : vector<10x256xf32>
    %cst_17 = arith.constant dense<0.000000e+00> : vector<256xf32>
    %34 = vector.multi_reduction <add>, %33, %cst_17 [0] : vector<10x256xf32> to vector<256xf32>
    %35 = vector.shape_cast %34 : vector<256xf32> to vector<1x256xf32>
    %36 = vector.broadcast %5 : f32 to vector<1x256xf32>
    %37 = arith.addf %35, %36 : vector<1x256xf32>
    %cst_18 = arith.constant 0.000000e+00 : f32
    %38 = vector.broadcast %cst_18 : f32 to vector<1x256xf32>
    %39 = arith.cmpf ogt, %37, %38 : vector<1x256xf32>
    %cst_19 = arith.constant 0.000000e+00 : f32
    %40 = vector.broadcast %cst_19 : f32 to vector<1x256xf32>
    %41 = arith.subf %40, %37 : vector<1x256xf32>
    %cst_20 = arith.constant -6.918787 : f32
    %42 = vector.broadcast %cst_20 : f32 to vector<1x256xf32>
    %43 = arith.mulf %37, %42 : vector<1x256xf32>
    %44 = arith.select %39, %41, %43 : vector<1x256xi1>, vector<1x256xf32>
    %45 = arith.mulf %7, %44 : vector<1x256xf32>
    %cst_21 = arith.constant 0.000000e+00 : f32
    %46 = vector.broadcast %cst_21 : f32 to vector<1x256xf32>
    %47 = arith.cmpf oge, %45, %46 : vector<1x256xf32>
    %48 = vector.shape_cast %47 : vector<1x256xi1> to vector<1x256xi1>
    %49 = vector.broadcast %48 : vector<1x256xi1> to vector<10x256xi1>
    %50 = vector.shape_cast %45 : vector<1x256xf32> to vector<1x256xf32>
    %51 = vector.broadcast %50 : vector<1x256xf32> to vector<10x256xf32>
    %52 = arith.select %49, %51, %6 : vector<10x256xi1>, vector<10x256xf32>
    %c1_22 = arith.constant 1 : index
    %c0_23 = arith.constant 0 : index
    %c0_24 = arith.constant 0 : index
    %53 = vector.load %arg5[%c1_22, %c0_23, %c0_24] : memref<2x10x256xf32, #tpu.memory_space<vmem>>, vector<1x10x256xf32>
    %54 = vector.shape_cast %53 : vector<1x10x256xf32> to vector<10x256xf32>
    %55 = vector.shape_cast %52 : vector<10x256xf32> to vector<1x10x256xf32>
    tpu.vector_store %arg5[%c1_22, %c0_23, %c0_24], %55 {strides = array<i32>} : memref<2x10x256xf32, #tpu.memory_space<vmem>>, vector<1x10x256xf32>,
    return
  }
  func.func @transform_0(%arg0: i32) -> (i32, i32) {
    %c0_i32 = arith.constant 0 : i32
    %c0_i32_0 = arith.constant 0 : i32
    return %c0_i32, %arg0 : i32, i32
  }
  func.func @transform_1(%arg0: i32) -> (i32, i32) {
    %c0_i32 = arith.constant 0 : i32
    %c0_i32_0 = arith.constant 0 : i32
    return %c0_i32, %arg0 : i32, i32
  }
  func.func @transform_2(%arg0: i32) -> (i32, i32, i32) {
    %c0_i32 = arith.constant 0 : i32
    %c0_i32_0 = arith.constant 0 : i32
    %c0_i32_1 = arith.constant 0 : i32
    %c0_i32_2 = arith.constant 0 : i32
    return %c0_i32, %c0_i32_0, %c0_i32_1 : i32, i32, i32
  }
  func.func @transform_3(%arg0: i32) -> i32 {
    %c0_i32 = arith.constant 0 : i32
    %c0_i32_0 = arith.constant 0 : i32
    return %c0_i32 : i32
  }
  func.func @transform_4(%arg0: i32) -> (i32, i32, i32) {
    %c0_i32 = arith.constant 0 : i32
    %c0_i32_0 = arith.constant 0 : i32
    %c0_i32_1 = arith.constant 0 : i32
    return %c0_i32, %c0_i32_0, %arg0 : i32, i32, i32
  }
}

</mosaic_0001>

<llo_original>
// kernel: tpu_custom_call.1
$region0: #{tpu_custom_call.1}
  #allocation0 [shape = 'u32[]', space=smem, size = 0x4, offset = 0x4, fixed_abs, tag = 'smem constant byte address 0x4 - core index']
  #allocation1 [shape = 'u32[72,128]{1,0:T(1,128)}', space=vmem, size = 0x9000, scoped, tag = 'internal scratch']
  %s0 = inlined_call_operand.hbm [shape: f32[10,640], index: 0, kind: input, shape index: {}]
  %s1 = inlined_call_operand.vmem [shape: f32[1,640], index: 1, kind: input, shape index: {}]
  %s2 = inlined_call_operand.vmem [shape: f32[2,10,1], index: 2, kind: input, shape index: {}]
  %s3 = inlined_call_operand.vmem [shape: f32[2], index: 3, kind: input, shape index: {}]
  %s4 = inlined_call_operand.vmem [shape: f32[2,10,640], index: 4, kind: output, shape index: {}]
  %s5 = sld [smem:[#allocation0]]
  $region119: #{tpu_custom_call.1} parent=0
    _
  %s7 = ssub.s32 1, %s5
  %s8 = scalar_select 0, %s7, %s5
  $region1: #{tpu_custom_call.1} parent=0
    #allocation2 [shape = 'u8[32768]{0}', space=vmem, size = 0x8000, scoped, tag = 'input window, operand 0']
    #allocation3 [shape = 's32[2]{0}', space=sflag, size = 0x8, scoped, tag = 'scoped memory for tpu_custom_call.1']
    #allocation4 [shape = 's32[2]{0}', space=sflag, size = 0x8, scoped, tag = 'scoped memory for tpu_custom_call.1']
    #allocation5 [shape = 'u8[512]{0}', space=smem, size = 0x200, scoped, tag = 'input window, operand 3, single buffered']
    #allocation6 [shape = 'u8[65536]{0}', space=vmem, size = 0x10000, scoped, tag = 'output window, operand 0']
    %9 = vsyncpa [#allocation3], 0
    %s10 = scalar_lea.sflag [#allocation3], 1
    %11 = vsyncpa %s10, 0
    %12 = vsyncpa [#allocation4], 0
    loop: start=0, step=1, limit=5
    $region2: #{tpu_custom_call.1} parent=1 // loop_pre_header
      _
    $region3: #{tpu_custom_call.1} parent=1 // loop_header
      %s14 = sphi 0, %s18
      %p15 = scmp.ge.s32.totalorder %s14, 5
      %s24 = sphi 0, %s26
      %s27 = sphi 0, %s24
      %s28 = sphi 0, %s27
      %s44 = sphi 0, %s28
      %s50 = sphi 0, %s52
      %s53 = sphi 0, %s50
      %s54 = sphi 0, %s53
      %s70 = sphi 0, %s54
      %s74 = sphi 0, %s74
      %s76 = sphi 0, %s74
      %s77 = sphi 0, %s76
      %s91 = sphi 0, %s77
      %s95 = sphi 0, %s95
      %s97 = sphi 0, %s95
      %s98 = sphi 0, %s97
      %s112 = sphi 0, %s98
      %s118 = sphi 0, %s120
      %s121 = sphi 0, %s118
      %s122 = sphi 0, %s121
      %s138 = sphi 0, %s122
    $region4: #{tpu_custom_call.1} parent=1 // loop_header_branch
      %17 = sbr.rel (%p15) target = $region8
    $region5: #{tpu_custom_call.1} parent=1 // loop_body
      %s19 = ssub.s32 %s14, 1
      %s20 = ssub.s32 %s14, 2
      %s21 = sadd.s32 %s14, 1
      %s22 = ssub.s32 %s14, %s21
      %p23 = scmp.eq.s32.totalorder %s22, 0
      %s25 = sadd.s32 %s24, 1
      %s26 = scalar_select %p23, %s24, %s25
      %p29 = pneg %p23
      %p30 = scmp.eq.s32.totalorder %s14, 2
      %p31 = por %p29, %p30
      %p32 = scmp.ne.s32.totalorder %s24, %s27
      %p33 = scmp.eq.s32.totalorder %s14, 0
      %p34 = por %p32, %p33
      %p35 = scmp.ne.s32.totalorder %s24, %s27
      %p36 = scmp.eq.s32.totalorder %s19, 2
      %p37 = por %p35, %p36
      %p38 = scmp.ne.s32.totalorder %s27, %s28
      %p39 = scmp.eq.s32.totalorder %s19, 0
      %p40 = por %p38, %p39
      %p41 = scmp.ne.s32.totalorder %s27, %s28
      %p42 = scmp.eq.s32.totalorder %s20, 2
      %p43 = por %p41, %p42
      %p45 = scmp.ne.s32.totalorder %s28, %s44
      %p46 = scmp.eq.s32.totalorder %s20, 0
      %p47 = por %p45, %p46
      %s48 = ssub.s32 %s14, %s21
      %p49 = scmp.eq.s32.totalorder %s48, 0
      %s51 = sadd.s32 %s50, 1
      %s52 = scalar_select %p49, %s50, %s51
      %p55 = pneg %p49
      %p56 = scmp.eq.s32.totalorder %s14, 2
      %p57 = por %p55, %p56
      %p58 = scmp.ne.s32.totalorder %s50, %s53
      %p59 = scmp.eq.s32.totalorder %s14, 0
      %p60 = por %p58, %p59
      %p61 = scmp.ne.s32.totalorder %s50, %s53
      %p62 = scmp.eq.s32.totalorder %s19, 2
      %p63 = por %p61, %p62
      %p64 = scmp.ne.s32.totalorder %s53, %s54
      %p65 = scmp.eq.s32.totalorder %s19, 0
      %p66 = por %p64, %p65
      %p67 = scmp.ne.s32.totalorder %s53, %s54
      %p68 = scmp.eq.s32.totalorder %s20, 2
      %p69 = por %p67, %p68
      %p71 = scmp.ne.s32.totalorder %s54, %s70
      %p72 = scmp.eq.s32.totalorder %s20, 0
      %p73 = por %p71, %p72
      %s75 = sadd.s32 %s74, 1
      %p78 = scmp.eq.s32.totalorder %s14, 2
      %p79 = scmp.ne.s32.totalorder %s74, %s76
      %p80 = scmp.eq.s32.totalorder %s14, 0
      %p81 = por %p79, %p80
      %p82 = scmp.ne.s32.totalorder %s74, %s76
      %p83 = scmp.eq.s32.totalorder %s19, 2
      %p84 = por %p82, %p83
      %p85 = scmp.ne.s32.totalorder %s76, %s77
      %p86 = scmp.eq.s32.totalorder %s19, 0
      %p87 = por %p85, %p86
      %p88 = scmp.ne.s32.totalorder %s76, %s77
      %p89 = scmp.eq.s32.totalorder %s20, 2
      %p90 = por %p88, %p89
      %p92 = scmp.ne.s32.totalorder %s77, %s91
      %p93 = scmp.eq.s32.totalorder %s20, 0
      %p94 = por %p92, %p93
      %s96 = sadd.s32 %s95, 1
      %p99 = scmp.eq.s32.totalorder %s14, 2
      %p100 = scmp.ne.s32.totalorder %s95, %s97
      %p101 = scmp.eq.s32.totalorder %s14, 0
      %p102 = por %p100, %p101
      %p103 = scmp.ne.s32.totalorder %s95, %s97
      %p104 = scmp.eq.s32.totalorder %s19, 2
      %p105 = por %p103, %p104
      %p106 = scmp.ne.s32.totalorder %s97, %s98
      %p107 = scmp.eq.s32.totalorder %s19, 0
      %p108 = por %p106, %p107
      %p109 = scmp.ne.s32.totalorder %s97, %s98
      %p110 = scmp.eq.s32.totalorder %s20, 2
      %p111 = por %p109, %p110
      %p113 = scmp.ne.s32.totalorder %s98, %s112
      %p114 = scmp.eq.s32.totalorder %s20, 0
      %p115 = por %p113, %p114
      %s116 = ssub.s32 %s14, %s21
      %p117 = scmp.eq.s32.totalorder %s116, 0
      %s119 = sadd.s32 %s118, 1
      %s120 = scalar_select %p117, %s118, %s119
      %p123 = pneg %p117
      %p124 = scmp.eq.s32.totalorder %s14, 2
      %p125 = por %p123, %p124
      %p126 = scmp.ne.s32.totalorder %s118, %s121
      %p127 = scmp.eq.s32.totalorder %s14, 0
      %p128 = por %p126, %p127
      %p129 = scmp.ne.s32.totalorder %s118, %s121
      %p130 = scmp.eq.s32.totalorder %s19, 2
      %p131 = por %p129, %p130
      %p132 = scmp.ne.s32.totalorder %s121, %s122
      %p133 = scmp.eq.s32.totalorder %s19, 0
      %p134 = por %p132, %p133
      %p135 = scmp.ne.s32.totalorder %s121, %s122
      %p136 = scmp.eq.s32.totalorder %s20, 2
      %p137 = por %p135, %p136
      %p139 = scmp.ne.s32.totalorder %s122, %s138
      %p140 = scmp.eq.s32.totalorder %s20, 0
      %p141 = por %p139, %p140
      %p142 = scmp.le.s32.totalorder 1, %s14
      %p143 = scmp.lt.s32.totalorder %s14, 4
      %p144 = pnand %p142, %p143
      %p145 = pneg %p144
      // Predicated region
      $region9: #{tpu_custom_call.1} parent=5 // pred_check
        _
      $region10: #{tpu_custom_call.1} parent=5 // pred_check_branch
        %147 = sbr.rel (%p144) target = $region12
      $region11: #{tpu_custom_call.1} parent=5 // pred_region
        %s148 = ssub.s32 %s14, 1
        // Predicated region
        $region13: #{tpu_custom_call.1} parent=11 // pred_check
          %p149 = pneg %p87
        $region14: #{tpu_custom_call.1} parent=11 // pred_check_branch
          %151 = sbr.rel (%p149) target = $region16
        $region15: #{tpu_custom_call.1} parent=11 // pred_region
          _
        $region16: #{tpu_custom_call.1} parent=11 // pred_fallthru
          _
        // Predicated region
        $region17: #{tpu_custom_call.1} parent=11 // pred_check
          %p152 = pneg %p108
        $region18: #{tpu_custom_call.1} parent=11 // pred_check_branch
          %154 = sbr.rel (%p152) target = $region20
        $region19: #{tpu_custom_call.1} parent=11 // pred_region
          %156 = vsyncadd [#allocation4], 0
          %s158 = sshll.u32 %s3, 4
          %s159 = int_to_ptr.vmem [resolvable:$true] %s158
          %161 = dma.vmem_to_smem %s159, 16, [#allocation5], [#allocation4]
        $region20: #{tpu_custom_call.1} parent=11 // pred_fallthru
          _
      $region12: #{tpu_custom_call.1} parent=5 // pred_fallthru
        _
      %p162 = scmp.lt.s32.totalorder %s14, 3
      // Predicated region
      $region21: #{tpu_custom_call.1} parent=5 // pred_check
        %p163 = pneg %p162
      $region22: #{tpu_custom_call.1} parent=5 // pred_check_branch
        %165 = sbr.rel (%p163) target = $region24
      $region23: #{tpu_custom_call.1} parent=5 // pred_region
        // Predicated region
        $region25: #{tpu_custom_call.1} parent=23 // pred_check
          %p166 = pneg %p34
        $region26: #{tpu_custom_call.1} parent=23 // pred_check_branch
          %168 = sbr.rel (%p166) target = $region28
        $region27: #{tpu_custom_call.1} parent=23 // pred_region
          %s169 = sand.u32 %s24, 1
          %s170 = scalar_lea.sflag [#allocation3], %s169
          %s171 = sand.u32 %s24, 1
          %s172 = smul.addr %s171, 32
          %s173 = scalar_lea.vmem [#allocation2], %s172
          %s174 = smul.u32 2, %s14
          %s175 = ssub.s32 5, %s174
          %p176 = scmp.lt.s32.totalorder %s175, 2
          %s177 = scalar_select %p176, %s175, 2
          %s178 = smul.u32 16, %s177
          %s179 = ssub.s32 32, %s178
          %s180 = sshll.u32 %s179, 4
          %181 = vsyncadd %s170, %s180
          %p182 = scmp.ne.s32.totalorder 0, %s178
          %s183 = smul.addr %s174, 8
          %s184 = scalar_lea.hbm %s0, %s183
          %s185 = smul.u32 %s177, 8
          %s186 = smul.u32 %s185, 2
          %s187 = sshll.u32 %s184, 4
          %s188 = int_to_ptr.hbm [resolvable:$true] %s187
          %s189 = sshll.u32 %s173, 4
          %s190 = int_to_ptr.vmem [resolvable:$true] %s189
          %s191 = sshll.u32 %s186, 4
          %195 = dma.hbm_to_vmem [thread:$0]  (%p182), %s188, %s191, %s190, %s170, 640, 256, %s185
        $region28: #{tpu_custom_call.1} parent=23 // pred_fallthru
          _
        // Predicated region
        $region29: #{tpu_custom_call.1} parent=23 // pred_check
          %p196 = pneg %p60
        $region30: #{tpu_custom_call.1} parent=23 // pred_check_branch
          %198 = sbr.rel (%p196) target = $region32
        $region31: #{tpu_custom_call.1} parent=23 // pred_region
          %s199 = smul.u32 2, %s14
          %s200 = ssub.s32 5, %s199
          %p201 = scmp.lt.s32.totalorder %s200, 2
          %s202 = scalar_select %p201, %s200, 2
          %p203 = scmp.lt.s32.totalorder %s199, 4
          %s204 = scalar_select %p203, %s199, 4
          %s205 = scalar_lea.vmem %s1, %s204
          %s206 = smul.u32 2, %s14
          %s207 = ssub.s32 5, %s206
          %p208 = scmp.lt.s32.totalorder %s207, 2
          %s209 = scalar_select %p208, %s207, 2
        $region32: #{tpu_custom_call.1} parent=23 // pred_fallthru
          _
      $region24: #{tpu_custom_call.1} parent=5 // pred_fallthru
        _
      %p210 = scmp.le.s32.totalorder 1, %s14
      %p211 = scmp.lt.s32.totalorder %s14, 4
      %p212 = pnand %p210, %p211
      %p213 = pneg %p212
      // Predicated region
      $region33: #{tpu_custom_call.1} parent=5 // pred_check
        _
      $region34: #{tpu_custom_call.1} parent=5 // pred_check_branch
        %215 = sbr.rel (%p212) target = $region36
      $region35: #{tpu_custom_call.1} parent=5 // pred_region
        %s216 = ssub.s32 %s14, 1
        %s217 = sand.u32 %s27, 1
        %s218 = scalar_lea.sflag [#allocation3], %s217
        %s219 = sand.u32 %s27, 1
        %s220 = smul.addr %s219, 32
        %s221 = scalar_lea.vmem [#allocation2], %s220
        // Predicated region
        $region37: #{tpu_custom_call.1} parent=35 // pred_check
          %p222 = pneg %p40
        $region38: #{tpu_custom_call.1} parent=35 // pred_check_branch
          %224 = sbr.rel (%p222) target = $region40
        $region39: #{tpu_custom_call.1} parent=35 // pred_region
          %226 = dma.done %s218, 512
        $region40: #{tpu_custom_call.1} parent=35 // pred_fallthru
          _
        // Predicated region
        $region41: #{tpu_custom_call.1} parent=35 // pred_check
          %p227 = pneg %p108
        $region42: #{tpu_custom_call.1} parent=35 // pred_check_branch
          %229 = sbr.rel (%p227) target = $region44
        $region43: #{tpu_custom_call.1} parent=35 // pred_region
          %231 = dma.done [#allocation4], 16
        $region44: #{tpu_custom_call.1} parent=35 // pred_fallthru
          _
        %232 = sfence
        %s233 = sand.u32 %s27, 1
        %s234 = scalar_lea.sflag [#allocation3], %s233
        %s235 = sand.u32 %s27, 1
        %s236 = smul.addr %s235, 32
        %s237 = scalar_lea.vmem [#allocation2], %s236
        %p238 = pneg %p40
        %p239 = pneg %p37
        %s240 = smul.u32 2, %s19
        %s241 = ssub.s32 5, %s240
        %p242 = scmp.lt.s32.totalorder %s241, 2
        %s243 = scalar_select %p242, %s241, 2
        %p244 = scmp.lt.s32.totalorder %s240, 4
        %s245 = scalar_select %p244, %s240, 4
        %s246 = scalar_lea.vmem %s1, %s245
        %p247 = pneg %p66
        %p248 = pneg %p63
        %p249 = pneg %p87
        %p250 = pneg %p84
        %p251 = pneg %p108
        %p252 = pneg %p105
        %p253 = pneg %p134
        %p254 = pneg %p131
        %s255 = sand.u32 %s121, 1
        %s256 = sand.u32 %s121, 1
        %s257 = smul.addr %s256, 64
        %s258 = scalar_lea.vmem [#allocation6], %s257
        %s259 = smul.u32 2, %s19
        %s260 = ssub.s32 5, %s259
        %p261 = scmp.lt.s32.totalorder %s260, 2
        %s262 = scalar_select %p261, %s260, 2
        %s263 = smul.u32 16, %s262
        %s264 = smul.u32 2, %s19
        %s265 = ssub.s32 5, %s264
        %p266 = scmp.lt.s32.totalorder %s265, 2
        %s267 = scalar_select %p266, %s265, 2
        %p268 = scmp.lt.s32.totalorder %s264, 4
        %s269 = scalar_select %p268, %s264, 4
        %s270 = scalar_lea.vmem %s1, %s269
        %s271 = smul.u32 2, %s19
        %s272 = ssub.s32 5, %s271
        %p273 = scmp.lt.s32.totalorder %s272, 2
        %s274 = scalar_select %p273, %s272, 2
        %s275 = smul.u32 2, %s19
        %s276 = ssub.s32 5, %s275
        %p277 = scmp.lt.s32.totalorder %s276, 2
        %s278 = scalar_select %p277, %s276, 2
        %s279 = smul.u32 32, %s278
        %v280 = vld [vmem:[%s2] sm:$0xff]
        %v281 = vld [vmem:[%s2 + $0x8] sm:$0x3]
        %s282 = scalar_lea.vmem %s2, 16
        %v283 = vld [vmem:[%s282] sm:$0xff]
        %v284 = vld [vmem:[%s282 + $0x8] sm:$0x3]
        %s285 = sld [smem:[#allocation5]]
        %s286 = sld [smem:[#allocation5 + $0x1]]
        %v287 = vld [vmem:[%s221] sm:$0xff]
        %v288 = vld [vmem:[%s221 + $0x8] sm:$0xff]
        %v289 = vld [vmem:[%s221 + $0x10] sm:$0x3]
        %v290 = vld [vmem:[%s221 + $0x18] sm:$0x3]
        %v291 = vld [vmem:[%s270] sm:$0x3]
        %293 = vset.pattern.permute.xlu0 0
        %294 = vperm.xlu0 %293, %v280
        %v295 = vpop.permute.xlu0 %294
        %298 = vset.pattern.permute.xlu0 0
        %299 = vperm.xlu0 %298, %v281
        %v300 = vpop.permute.xlu0 %299
        %v302 = vmul.f32 %v287, %v295
        %v303 = vmul.f32 %v288, %v295
        %v304 = vmul.f32 %v289, %v300
        %v305 = vmul.f32 %v290, %v300
        %vm306 = vcmask 1041408
        %v307 = vsel %vm306, %v304, 0.0
        %v308 = vadd.f32 %v302, %v307
        %v309 = vrot.slane %v308, 4
        %v310 = vadd.f32 %v308, %v309
        %v311 = vrot.slane %v310, 2
        %v312 = vadd.f32 %v310, %v311
        %v313 = vrot.slane %v312, 1
        %v314 = vadd.f32 %v312, %v313
        %v315 = vsel %vm306, %v305, 0.0
        %v316 = vadd.f32 %v303, %v315
        %v317 = vrot.slane %v316, 4
        %v318 = vadd.f32 %v316, %v317
        %v319 = vrot.slane %v318, 2
        %v320 = vadd.f32 %v318, %v319
        %v321 = vrot.slane %v320, 1
        %v322 = vadd.f32 %v320, %v321
        %v323 = vstv %s285
        %v324 = vadd.f32 %v314, %v323
        %v325 = vadd.f32 %v322, %v323
        %vm326 = vcmp.gt.f32.partialorder %v324, 0.0
        %vm327 = vcmp.gt.f32.partialorder %v325, 0.0
        %v328 = vsub.f32 0.0, %v324
        %v329 = vsub.f32 0.0, %v325
        %v330 = vmul.f32 %v324, -6.918787
        %v331 = vmul.f32 %v325, -6.918787
        %v332 = vsel %vm326, %v328, %v330
        %v333 = vsel %vm327, %v329, %v331
        %v336 = vrot.slane %v333, 7
        %vm337 = vcmask 1040384
        %v338 = vsel %vm337, %v332, %v336
        %v340 = vmul.f32 %v291, %v338
        %vm341 = vcmp.ge.f32.partialorder %v340, 0.0
        %v342 = vsel %vm341, 1, 0
        %v343 = vperm.slane %v342, 0
        %v344 = vperm.slane %v342, 1
        %vm345 = vcmp.eq.s32.totalorder %v343, 1
        %vm346 = vcmp.eq.s32.totalorder %v344, 1
        %v348 = vperm.slane %v340, 0
        %v349 = vperm.slane %v340, 1
        %v352 = vsel %vm345, %v348, %v287
        %v353 = vsel %vm346, %v349, %v288
        %v354 = vsel %vm345, %v348, %v289
        %v355 = vsel %vm346, %v349, %v290
        %356 = vst [vmem:[%s258] sm:$0xff] %v352
        %357 = vst [vmem:[%s258 + $0x8] sm:$0xff] %v353
        %358 = vst [vmem:[%s258 + $0x10] sm:$0x3] %v354
        %359 = vst [vmem:[%s258 + $0x18] sm:$0x3] %v355
        %361 = vset.pattern.permute.xlu0 0
        %362 = vperm.xlu0 %361, %v283
        %v363 = vpop.permute.xlu0 %362
        %366 = vset.pattern.permute.xlu0 0
        %367 = vperm.xlu0 %366, %v284
        %v368 = vpop.permute.xlu0 %367
        %v370 = vmul.f32 %v287, %v363
        %v371 = vmul.f32 %v288, %v363
        %v372 = vmul.f32 %v289, %v368
        %v373 = vmul.f32 %v290, %v368
        %v374 = vsel %vm306, %v372, 0.0
        %v375 = vadd.f32 %v370, %v374
        %v376 = vrot.slane %v375, 4
        %v377 = vadd.f32 %v375, %v376
        %v378 = vrot.slane %v377, 2
        %v379 = vadd.f32 %v377, %v378
        %v380 = vrot.slane %v379, 1
        %v381 = vadd.f32 %v379, %v380
        %v382 = vsel %vm306, %v373, 0.0
        %v383 = vadd.f32 %v371, %v382
        %v384 = vrot.slane %v383, 4
        %v385 = vadd.f32 %v383, %v384
        %v386 = vrot.slane %v385, 2
        %v387 = vadd.f32 %v385, %v386
        %v388 = vrot.slane %v387, 1
        %v389 = vadd.f32 %v387, %v388
        %v390 = vstv %s286
        %v391 = vadd.f32 %v381, %v390
        %v392 = vadd.f32 %v389, %v390
        %vm393 = vcmp.gt.f32.partialorder %v391, 0.0
        %vm394 = vcmp.gt.f32.partialorder %v392, 0.0
        %v395 = vsub.f32 0.0, %v391
        %v396 = vsub.f32 0.0, %v392
        %v397 = vmul.f32 %v391, -6.918787
        %v398 = vmul.f32 %v392, -6.918787
        %v399 = vsel %vm393, %v395, %v397
        %v400 = vsel %vm394, %v396, %v398
        %v403 = vrot.slane %v400, 7
        %v404 = vsel %vm337, %v399, %v403
        %v406 = vmul.f32 %v291, %v404
        %vm407 = vcmp.ge.f32.partialorder %v406, 0.0
        %v408 = vsel %vm407, 1, 0
        %v409 = vperm.slane %v408, 0
        %v410 = vperm.slane %v408, 1
        %vm411 = vcmp.eq.s32.totalorder %v409, 1
        %vm412 = vcmp.eq.s32.totalorder %v410, 1
        %v414 = vperm.slane %v406, 0
        %v415 = vperm.slane %v406, 1
        %v418 = vsel %vm411, %v414, %v287
        %v419 = vsel %vm412, %v415, %v288
        %v420 = vsel %vm411, %v414, %v289
        %v421 = vsel %vm412, %v415, %v290
        %s422 = scalar_lea.vmem %s258, 32 [#allocation6]
        %423 = vst [vmem:[%s422] sm:$0xff] %v418
        %424 = vst [vmem:[%s422 + $0x8] sm:$0xff] %v419
        %425 = vst [vmem:[%s422 + $0x10] sm:$0x3] %v420
        %426 = vst [vmem:[%s422 + $0x18] sm:$0x3] %v421
        %s427 = sand.u32 %s121, 1
        %s428 = sand.u32 %s121, 1
        %s429 = smul.addr %s428, 64
        %s430 = scalar_lea.vmem [#allocation6], %s429
        // Predicated region
        $region45: #{tpu_custom_call.1} parent=35 // pred_check
          %p431 = pneg %p131
        $region46: #{tpu_custom_call.1} parent=35 // pred_check_branch
          %433 = sbr.rel (%p431) target = $region48
        $region47: #{tpu_custom_call.1} parent=35 // pred_region
          %s434 = smul.u32 2, %s19
          %s435 = ssub.s32 5, %s434
          %p436 = scmp.lt.s32.totalorder %s435, 2
          %s437 = scalar_select %p436, %s435, 2
          %s438 = smul.u32 32, %s437
          %p439 = scmp.ne.s32.totalorder 0, %s438
          %s440 = smul.addr %s434, 8
          %s441 = scalar_lea.vmem %s4, %s440
          %s442 = smul.u32 %s437, 8
          // Predicated region
          $region49: #{tpu_custom_call.1} parent=47 // pred_check
            %p443 = pneg %p439
          $region50: #{tpu_custom_call.1} parent=47 // pred_check_branch
            %445 = sbr.rel (%p443) target = $region52
          $region51: #{tpu_custom_call.1} parent=47 // pred_region
            %p446 = scmp.lt.u32.totalorder %s442, 8
            %p447 = pneg %p446
            // Predicated region
            $region53: #{tpu_custom_call.1} parent=51 // pred_check
              _
            $region54: #{tpu_custom_call.1} parent=51 // pred_check_branch
              %449 = sbr.rel (%p446) target = $region56
            $region55: #{tpu_custom_call.1} parent=51 // pred_region
              %s471 = sand.u32 %s442, 7
              %p472 = scmp.eq.s32.totalorder %s471, 0
              // Predicated region
              $region68: #{tpu_custom_call.1} parent=55 // pred_check
                %p473 = pneg %p472
              $region69: #{tpu_custom_call.1} parent=55 // pred_check_branch
                %475 = sbr.rel (%p473) target = $region71
              $region70: #{tpu_custom_call.1} parent=55 // pred_region
                %s476 = sshrl.u32 %s442, 3
                %s477 = sshrl.u32 %s476, 3
                // While loop
                $region72: #{tpu_custom_call.1} parent=70 // loop_pre_header
                  _
                $region73: #{tpu_custom_call.1} parent=70 // loop_header
                  %s479 = sphi 0, %s481
                  %p480 = scmp.ge.s32.totalorder %s479, %s477
                  %s484 = sphi 0, %s553
                  %s485 = sphi %s430, %s556
                  %s486 = sphi %s441, %s557
                $region74: #{tpu_custom_call.1} parent=70 // loop_header_branch
                  %483 = sbr.rel (%p480) target = $region78
                $region75: #{tpu_custom_call.1} parent=70 // loop_body
                  %v487 = vld [vmem:[%s485] sm:$0xff]
                  %488 = vst [vmem:[%s486] sm:$0xff] %v487
                  %v489 = vld [vmem:[%s485 + $0x8] sm:$0xff]
                  %490 = vst [vmem:[%s486 + $0x8] sm:$0xff] %v489
                  %v491 = vld [vmem:[%s485 + $0x10] sm:$0xff]
                  %492 = vst [vmem:[%s486 + $0x10] sm:$0xff] %v491
                  %v493 = vld [vmem:[%s485 + $0x18] sm:$0xff]
                  %494 = vst [vmem:[%s486 + $0x18] sm:$0xff] %v493
                  %v495 = vld [vmem:[%s485 + $0x20] sm:$0xff]
                  %496 = vst [vmem:[%s486 + $0x20] sm:$0xff] %v495
                  %v497 = vld [vmem:[%s485 + $0x28] sm:$0xff]
                  %498 = vst [vmem:[%s486 + $0x28] sm:$0xff] %v497
                  %v499 = vld [vmem:[%s485 + $0x30] sm:$0xff]
                  %500 = vst [vmem:[%s486 + $0x30] sm:$0xff] %v499
                  %v501 = vld [vmem:[%s485 + $0x38] sm:$0xff]
                  %502 = vst [vmem:[%s486 + $0x38] sm:$0xff] %v501
                  %v503 = vld [vmem:[%s485 + $0x10] sm:$0xff]
                  %504 = vst [vmem:[%s486 + $0x28] sm:$0xff] %v503
                  %v505 = vld [vmem:[%s485 + $0x18] sm:$0xff]
                  %506 = vst [vmem:[%s486 + $0x30] sm:$0xff] %v505
                  %v507 = vld [vmem:[%s485 + $0x20] sm:$0xff]
                  %508 = vst [vmem:[%s486 + $0x38] sm:$0xff] %v507
                  %v509 = vld [vmem:[%s485 + $0x28] sm:$0xff]
                  %510 = vst [vmem:[%s486 + $0x40] sm:$0xff] %v509
                  %v511 = vld [vmem:[%s485 + $0x30] sm:$0xff]
                  %512 = vst [vmem:[%s486 + $0x48] sm:$0xff] %v511
                  %v513 = vld [vmem:[%s485 + $0x38] sm:$0xff]
                  %514 = vst [vmem:[%s486 + $0x50] sm:$0xff] %v513
                  %v515 = vld [vmem:[%s485 + $0x40] sm:$0xff]
                  %516 = vst [vmem:[%s486 + $0x58] sm:$0xff] %v515
                  %v517 = vld [vmem:[%s485 + $0x48] sm:$0xff]
                  %518 = vst [vmem:[%s486 + $0x60] sm:$0xff] %v517
                  %v519 = vld [vmem:[%s485 + $0x20] sm:$0xff]
                  %520 = vst [vmem:[%s486 + $0x50] sm:$0xff] %v519
                  %v521 = vld [vmem:[%s485 + $0x28] sm:$0xff]
                  %522 = vst [vmem:[%s486 + $0x58] sm:$0xff] %v521
                  %v523 = vld [vmem:[%s485 + $0x30] sm:$0xff]
                  %524 = vst [vmem:[%s486 + $0x60] sm:$0xff] %v523
                  %v525 = vld [vmem:[%s485 + $0x38] sm:$0xff]
                  %526 = vst [vmem:[%s486 + $0x68] sm:$0xff] %v525
                  %v527 = vld [vmem:[%s485 + $0x40] sm:$0xff]
                  %528 = vst [vmem:[%s486 + $0x70] sm:$0xff] %v527
                  %v529 = vld [vmem:[%s485 + $0x48] sm:$0xff]
                  %530 = vst [vmem:[%s486 + $0x78] sm:$0xff] %v529
                  %v531 = vld [vmem:[%s485 + $0x50] sm:$0xff]
                  %532 = vst [vmem:[%s486 + $0x80] sm:$0xff] %v531
                  %v533 = vld [vmem:[%s485 + $0x58] sm:$0xff]
                  %534 = vst [vmem:[%s486 + $0x88] sm:$0xff] %v533
                  %v535 = vld [vmem:[%s485 + $0x30] sm:$0xff]
                  %536 = vst [vmem:[%s486 + $0x78] sm:$0xff] %v535
                  %v537 = vld [vmem:[%s485 + $0x38] sm:$0xff]
                  %538 = vst [vmem:[%s486 + $0x80] sm:$0xff] %v537
                  %v539 = vld [vmem:[%s485 + $0x40] sm:$0xff]
                  %540 = vst [vmem:[%s486 + $0x88] sm:$0xff] %v539
                  %v541 = vld [vmem:[%s485 + $0x48] sm:$0xff]
                  %542 = vst [vmem:[%s486 + $0x90] sm:$0xff] %v541
                  %v543 = vld [vmem:[%s485 + $0x50] sm:$0xff]
                  %544 = vst [vmem:[%s486 + $0x98] sm:$0xff] %v543
                  %v545 = vld [vmem:[%s485 + $0x58] sm:$0xff]
                  %546 = vst [vmem:[%s486 + $0xa0] sm:$0xff] %v545
                  %v547 = vld [vmem:[%s485 + $0x60] sm:$0xff]
                  %548 = vst [vmem:[%s486 + $0xa8] sm:$0xff] %v547
                  %v549 = vld [vmem:[%s485 + $0x68] sm:$0xff]
                  %550 = vst [vmem:[%s486 + $0xb0] sm:$0xff] %v549
                  %s551 = sadd.s32 1, %s484
                  %p552 = scmp.ge.s32.totalorder %s551, %s477
                  %s553 = scalar_select %p552, 0, %s551
                  %s554 = smul.u32 %s553, 64
                  %s555 = smul.u32 %s553, 64
                  %s556 = scalar_lea.vmem %s430, %s554 [#allocation6]
                  %s557 = scalar_lea.vmem %s441, %s555
                $region76: #{tpu_custom_call.1} parent=70 // loop_footer
                  %s481 = sadd.s32 %s479, 1
                $region77: #{tpu_custom_call.1} parent=70 // loop_footer_branch
                  %478 = sbr.rel target = $region73
                $region78: #{tpu_custom_call.1} parent=70 // loop_exit
                  _
                %s558 = sshrl.u32 %s476, 3
                %s559 = sand.u32 %s476, 7
                %s560 = smul.u32 %s558, 8
                %s561 = smul.u32 8, %s560
                %s562 = scalar_lea.vmem %s430, %s561 [#allocation6]
                %s563 = smul.u32 8, %s560
                %s564 = scalar_lea.vmem %s441, %s563
                // While loop
                $region79: #{tpu_custom_call.1} parent=70 // loop_pre_header
                  _
                $region80: #{tpu_custom_call.1} parent=70 // loop_header
                  %s566 = sphi 0, %s568
                  %p567 = scmp.ge.s32.totalorder %s566, %s559
                  %s571 = sphi 0, %s584
                  %s572 = sphi %s562, %s587
                  %s573 = sphi %s564, %s588
                $region81: #{tpu_custom_call.1} parent=70 // loop_header_branch
                  %570 = sbr.rel (%p567) target = $region85
                $region82: #{tpu_custom_call.1} parent=70 // loop_body
                  %v574 = vld [vmem:[%s572] sm:$0xff]
                  %575 = vst [vmem:[%s573] sm:$0xff] %v574
                  %v576 = vld [vmem:[%s572 + $0x10] sm:$0xff]
                  %577 = vst [vmem:[%s573 + $0x28] sm:$0xff] %v576
                  %v578 = vld [vmem:[%s572 + $0x20] sm:$0xff]
                  %579 = vst [vmem:[%s573 + $0x50] sm:$0xff] %v578
                  %v580 = vld [vmem:[%s572 + $0x30] sm:$0xff]
                  %581 = vst [vmem:[%s573 + $0x78] sm:$0xff] %v580
                  %s582 = sadd.s32 1, %s571
                  %p583 = scmp.ge.s32.totalorder %s582, %s559
                  %s584 = scalar_select %p583, 0, %s582
                  %s585 = smul.u32 %s584, 8
                  %s586 = smul.u32 %s584, 8
                  %s587 = scalar_lea.vmem %s562, %s585 [#allocation6]
                  %s588 = scalar_lea.vmem %s564, %s586
                $region83: #{tpu_custom_call.1} parent=70 // loop_footer
                  %s568 = sadd.s32 %s566, 1
                $region84: #{tpu_custom_call.1} parent=70 // loop_footer_branch
                  %565 = sbr.rel target = $region80
                $region85: #{tpu_custom_call.1} parent=70 // loop_exit
                  _
              $region71: #{tpu_custom_call.1} parent=55 // pred_fallthru
                _
              %p589 = pneg %p472
              // Predicated region
              $region86: #{tpu_custom_call.1} parent=55 // pred_check
                _
              $region87: #{tpu_custom_call.1} parent=55 // pred_check_branch
                %591 = sbr.rel (%p472) target = $region89
              $region88: #{tpu_custom_call.1} parent=55 // pred_region
                %s592 = sand.u32 %s442, 7
                %s593 = ssub.s32 %s442, %s592
                %s594 = scalar_lea.vmem %s430, %s593 [#allocation6]
                %s595 = ssub.s32 %s442, %s592
                %s596 = scalar_lea.vmem %s441, %s595
                %s597 = sshrl.u32 %s442, 3
                %s598 = sshrl.u32 %s597, 3
                // While loop
                $region90: #{tpu_custom_call.1} parent=88 // loop_pre_header
                  _
                $region91: #{tpu_custom_call.1} parent=88 // loop_header
                  %s600 = sphi 0, %s602
                  %p601 = scmp.ge.s32.totalorder %s600, %s598
                  %s605 = sphi 0, %s674
                  %s606 = sphi %s430, %s677
                  %s607 = sphi %s441, %s678
                $region92: #{tpu_custom_call.1} parent=88 // loop_header_branch
                  %604 = sbr.rel (%p601) target = $region96
                $region93: #{tpu_custom_call.1} parent=88 // loop_body
                  %v608 = vld [vmem:[%s606] sm:$0xff]
                  %609 = vst [vmem:[%s607] sm:$0xff] %v608
                  %v610 = vld [vmem:[%s606 + $0x8] sm:$0xff]
                  %611 = vst [vmem:[%s607 + $0x8] sm:$0xff] %v610
                  %v612 = vld [vmem:[%s606 + $0x10] sm:$0xff]
                  %613 = vst [vmem:[%s607 + $0x10] sm:$0xff] %v612
                  %v614 = vld [vmem:[%s606 + $0x18] sm:$0xff]
                  %615 = vst [vmem:[%s607 + $0x18] sm:$0xff] %v614
                  %v616 = vld [vmem:[%s606 + $0x20] sm:$0xff]
                  %617 = vst [vmem:[%s607 + $0x20] sm:$0xff] %v616
                  %v618 = vld [vmem:[%s606 + $0x28] sm:$0xff]
                  %619 = vst [vmem:[%s607 + $0x28] sm:$0xff] %v618
                  %v620 = vld [vmem:[%s606 + $0x30] sm:$0xff]
                  %621 = vst [vmem:[%s607 + $0x30] sm:$0xff] %v620
                  %v622 = vld [vmem:[%s606 + $0x38] sm:$0xff]
                  %623 = vst [vmem:[%s607 + $0x38] sm:$0xff] %v622
                  %v624 = vld [vmem:[%s606 + $0x10] sm:$0xff]
                  %625 = vst [vmem:[%s607 + $0x28] sm:$0xff] %v624
                  %v626 = vld [vmem:[%s606 + $0x18] sm:$0xff]
                  %627 = vst [vmem:[%s607 + $0x30] sm:$0xff] %v626
                  %v628 = vld [vmem:[%s606 + $0x20] sm:$0xff]
                  %629 = vst [vmem:[%s607 + $0x38] sm:$0xff] %v628
                  %v630 = vld [vmem:[%s606 + $0x28] sm:$0xff]
                  %631 = vst [vmem:[%s607 + $0x40] sm:$0xff] %v630
                  %v632 = vld [vmem:[%s606 + $0x30] sm:$0xff]
                  %633 = vst [vmem:[%s607 + $0x48] sm:$0xff] %v632
                  %v634 = vld [vmem:[%s606 + $0x38] sm:$0xff]
                  %635 = vst [vmem:[%s607 + $0x50] sm:$0xff] %v634
                  %v636 = vld [vmem:[%s606 + $0x40] sm:$0xff]
                  %637 = vst [vmem:[%s607 + $0x58] sm:$0xff] %v636
                  %v638 = vld [vmem:[%s606 + $0x48] sm:$0xff]
                  %639 = vst [vmem:[%s607 + $0x60] sm:$0xff] %v638
                  %v640 = vld [vmem:[%s606 + $0x20] sm:$0xff]
                  %641 = vst [vmem:[%s607 + $0x50] sm:$0xff] %v640
                  %v642 = vld [vmem:[%s606 + $0x28] sm:$0xff]
                  %643 = vst [vmem:[%s607 + $0x58] sm:$0xff] %v642
                  %v644 = vld [vmem:[%s606 + $0x30] sm:$0xff]
                  %645 = vst [vmem:[%s607 + $0x60] sm:$0xff] %v644
                  %v646 = vld [vmem:[%s606 + $0x38] sm:$0xff]
                  %647 = vst [vmem:[%s607 + $0x68] sm:$0xff] %v646
                  %v648 = vld [vmem:[%s606 + $0x40] sm:$0xff]
                  %649 = vst [vmem:[%s607 + $0x70] sm:$0xff] %v648
                  %v650 = vld [vmem:[%s606 + $0x48] sm:$0xff]
                  %651 = vst [vmem:[%s607 + $0x78] sm:$0xff] %v650
                  %v652 = vld [vmem:[%s606 + $0x50] sm:$0xff]
                  %653 = vst [vmem:[%s607 + $0x80] sm:$0xff] %v652
                  %v654 = vld [vmem:[%s606 + $0x58] sm:$0xff]
                  %655 = vst [vmem:[%s607 + $0x88] sm:$0xff] %v654
                  %v656 = vld [vmem:[%s606 + $0x30] sm:$0xff]
                  %657 = vst [vmem:[%s607 + $0x78] sm:$0xff] %v656
                  %v658 = vld [vmem:[%s606 + $0x38] sm:$0xff]
                  %659 = vst [vmem:[%s607 + $0x80] sm:$0xff] %v658
                  %v660 = vld [vmem:[%s606 + $0x40] sm:$0xff]
                  %661 = vst [vmem:[%s607 + $0x88] sm:$0xff] %v660
                  %v662 = vld [vmem:[%s606 + $0x48] sm:$0xff]
                  %663 = vst [vmem:[%s607 + $0x90] sm:$0xff] %v662
                  %v664 = vld [vmem:[%s606 + $0x50] sm:$0xff]
                  %665 = vst [vmem:[%s607 + $0x98] sm:$0xff] %v664
                  %v666 = vld [vmem:[%s606 + $0x58] sm:$0xff]
                  %667 = vst [vmem:[%s607 + $0xa0] sm:$0xff] %v666
                  %v668 = vld [vmem:[%s606 + $0x60] sm:$0xff]
                  %669 = vst [vmem:[%s607 + $0xa8] sm:$0xff] %v668
                  %v670 = vld [vmem:[%s606 + $0x68] sm:$0xff]
                  %671 = vst [vmem:[%s607 + $0xb0] sm:$0xff] %v670
                  %s672 = sadd.s32 1, %s605
                  %p673 = scmp.ge.s32.totalorder %s672, %s598
                  %s674 = scalar_select %p673, 0, %s672
                  %s675 = smul.u32 %s674, 64
                  %s676 = smul.u32 %s674, 64
                  %s677 = scalar_lea.vmem %s430, %s675 [#allocation6]
                  %s678 = scalar_lea.vmem %s441, %s676
                $region94: #{tpu_custom_call.1} parent=88 // loop_footer
                  %s602 = sadd.s32 %s600, 1
                $region95: #{tpu_custom_call.1} parent=88 // loop_footer_branch
                  %599 = sbr.rel target = $region91
                $region96: #{tpu_custom_call.1} parent=88 // loop_exit
                  _
                %s679 = sshrl.u32 %s597, 3
                %s680 = sand.u32 %s597, 7
                %s681 = smul.u32 %s679, 8
                %s682 = smul.u32 8, %s681
                %s683 = scalar_lea.vmem %s430, %s682 [#allocation6]
                %s684 = smul.u32 8, %s681
                %s685 = scalar_lea.vmem %s441, %s684
                // While loop
                $region97: #{tpu_custom_call.1} parent=88 // loop_pre_header
                  _
                $region98: #{tpu_custom_call.1} parent=88 // loop_header
                  %s687 = sphi 0, %s689
                  %p688 = scmp.ge.s32.totalorder %s687, %s680
                  %s692 = sphi 0, %s705
                  %s693 = sphi %s683, %s708
                  %s694 = sphi %s685, %s709
                $region99: #{tpu_custom_call.1} parent=88 // loop_header_branch
                  %691 = sbr.rel (%p688) target = $region103
                $region100: #{tpu_custom_call.1} parent=88 // loop_body
                  %v695 = vld [vmem:[%s693] sm:$0xff]
                  %696 = vst [vmem:[%s694] sm:$0xff] %v695
                  %v697 = vld [vmem:[%s693 + $0x10] sm:$0xff]
                  %698 = vst [vmem:[%s694 + $0x28] sm:$0xff] %v697
                  %v699 = vld [vmem:[%s693 + $0x20] sm:$0xff]
                  %700 = vst [vmem:[%s694 + $0x50] sm:$0xff] %v699
                  %v701 = vld [vmem:[%s693 + $0x30] sm:$0xff]
                  %702 = vst [vmem:[%s694 + $0x78] sm:$0xff] %v701
                  %s703 = sadd.s32 1, %s692
                  %p704 = scmp.ge.s32.totalorder %s703, %s680
                  %s705 = scalar_select %p704, 0, %s703
                  %s706 = smul.u32 %s705, 8
                  %s707 = smul.u32 %s705, 8
                  %s708 = scalar_lea.vmem %s683, %s706 [#allocation6]
                  %s709 = scalar_lea.vmem %s685, %s707
                $region101: #{tpu_custom_call.1} parent=88 // loop_footer
                  %s689 = sadd.s32 %s687, 1
                $region102: #{tpu_custom_call.1} parent=88 // loop_footer_branch
                  %686 = sbr.rel target = $region98
                $region103: #{tpu_custom_call.1} parent=88 // loop_exit
                  _
                %s710 = sshll.u32 1, %s592
                %s711 = ssub.s32 %s710, 1
                loop: start=0, step=1, limit=1
                $region104: #{tpu_custom_call.1} parent=88 // loop_pre_header
                  _
                $region105: #{tpu_custom_call.1} parent=88 // loop_header
                  %s713 = sphi 0, %s717
                  %p714 = scmp.ge.s32.totalorder %s713, 1
                  %s718 = sphi %s594, %s594
                  %s719 = sphi %s596, %s596
                $region106: #{tpu_custom_call.1} parent=88 // loop_header_branch
                  %716 = sbr.rel (%p714) target = $region110
                $region107: #{tpu_custom_call.1} parent=88 // loop_body
                  %v720 = vld [vmem:[%s718] sm:%s711]
                  %721 = vst [vmem:[%s719] sm:%s711] %v720
                  %v722 = vld [vmem:[%s718 + $0x10] sm:%s711]
                  %723 = vst [vmem:[%s719 + $0x28] sm:%s711] %v722
                  %v724 = vld [vmem:[%s718 + $0x20] sm:%s711]
                  %725 = vst [vmem:[%s719 + $0x50] sm:%s711] %v724
                  %v726 = vld [vmem:[%s718 + $0x30] sm:%s711]
                  %727 = vst [vmem:[%s719 + $0x78] sm:%s711] %v726
                $region108: #{tpu_custom_call.1} parent=88 // loop_footer
                  %s717 = sadd.s32 1, %s713
                $region109: #{tpu_custom_call.1} parent=88 // loop_footer_branch
                  %712 = sbr.rel target = $region105
                $region110: #{tpu_custom_call.1} parent=88 // loop_exit
                  _
              $region89: #{tpu_custom_call.1} parent=55 // pred_fallthru
                _
            $region56: #{tpu_custom_call.1} parent=51 // pred_fallthru
              _
            // Predicated region
            $region57: #{tpu_custom_call.1} parent=51 // pred_check
              %p450 = pneg %p446
            $region58: #{tpu_custom_call.1} parent=51 // pred_check_branch
              %452 = sbr.rel (%p450) target = $region60
            $region59: #{tpu_custom_call.1} parent=51 // pred_region
              %s453 = sshll.u32 1, %s442
              %s454 = ssub.s32 %s453, 1
              loop: start=0, step=1, limit=1
              $region61: #{tpu_custom_call.1} parent=59 // loop_pre_header
                _
              $region62: #{tpu_custom_call.1} parent=59 // loop_header
                %s456 = sphi 0, %s460
                %p457 = scmp.ge.s32.totalorder %s456, 1
                %s461 = sphi %s430, %s430
                %s462 = sphi %s441, %s441
              $region63: #{tpu_custom_call.1} parent=59 // loop_header_branch
                %459 = sbr.rel (%p457) target = $region67
              $region64: #{tpu_custom_call.1} parent=59 // loop_body
                %v463 = vld [vmem:[%s461] sm:%s454]
                %464 = vst [vmem:[%s462] sm:%s454] %v463
                %v465 = vld [vmem:[%s461 + $0x10] sm:%s454]
                %466 = vst [vmem:[%s462 + $0x28] sm:%s454] %v465
                %v467 = vld [vmem:[%s461 + $0x20] sm:%s454]
                %468 = vst [vmem:[%s462 + $0x50] sm:%s454] %v467
                %v469 = vld [vmem:[%s461 + $0x30] sm:%s454]
                %470 = vst [vmem:[%s462 + $0x78] sm:%s454] %v469
              $region65: #{tpu_custom_call.1} parent=59 // loop_footer
                %s460 = sadd.s32 1, %s456
              $region66: #{tpu_custom_call.1} parent=59 // loop_footer_branch
                %455 = sbr.rel target = $region62
              $region67: #{tpu_custom_call.1} parent=59 // loop_exit
                _
            $region60: #{tpu_custom_call.1} parent=51 // pred_fallthru
              _
          $region52: #{tpu_custom_call.1} parent=47 // pred_fallthru
            _
          %728 = vnop
        $region48: #{tpu_custom_call.1} parent=35 // pred_fallthru
          _
      $region36: #{tpu_custom_call.1} parent=5 // pred_fallthru
        _
      %p729 = scmp.le.s32.totalorder 2, %s14
      // Predicated region
      $region111: #{tpu_custom_call.1} parent=5 // pred_check
        %p730 = pneg %p729
      $region112: #{tpu_custom_call.1} parent=5 // pred_check_branch
        %732 = sbr.rel (%p730) target = $region114
      $region113: #{tpu_custom_call.1} parent=5 // pred_region
        %s733 = ssub.s32 %s14, 2
        // Predicated region
        $region115: #{tpu_custom_call.1} parent=113 // pred_check
          %p734 = pneg %p137
        $region116: #{tpu_custom_call.1} parent=113 // pred_check_branch
          %736 = sbr.rel (%p734) target = $region118
        $region117: #{tpu_custom_call.1} parent=113 // pred_region
          %s737 = sand.u32 %s122, 1
          %s738 = sand.u32 %s122, 1
          %s739 = smul.addr %s738, 64
          %s740 = scalar_lea.vmem [#allocation6], %s739
        $region118: #{tpu_custom_call.1} parent=113 // pred_fallthru
          _
      $region114: #{tpu_custom_call.1} parent=5 // pred_fallthru
        _
    $region6: #{tpu_custom_call.1} parent=1 // loop_footer
      %s18 = sadd.s32 1, %s14
    $region7: #{tpu_custom_call.1} parent=1 // loop_footer_branch
      %13 = sbr.rel target = $region3
    $region8: #{tpu_custom_call.1} parent=1 // loop_exit
      _
    %741 = vsyncpa [#allocation3], 1
    %s742 = scalar_lea.sflag [#allocation3], 1
    %743 = vsyncpa %s742, 1
    %744 = vsyncpa [#allocation4], 1
    %s745 = scalar_lea.sflag [#allocation4], 1
    %746 = vsyncpa %s745, 1

</llo_original>
